<compile_context>
chip_gen: v7x
topology: tpu7x:2x2x1
jax: 0.10.0
libtpu: 0.0.40
codegen_flags: <defaults>
</compile_context>

<pallas_src>
import numpy as np
import jax
import jax.numpy as jnp
from jax.experimental import pallas as pl
from jax.experimental.pallas import tpu as pltpu

# ----------------------------- sizes (small synthetic SMPL) -----------------
N_BATCH = 2
N_VERTS = 500            # deliberately NOT a multiple of 128 -> exercises padding
N_JOINTS = 24            # SMPL kinematic joints
N_BETAS = 10
N_POSE_FEAT = (N_JOINTS - 1) * 9          # 207
N_BLEND_ROWS = N_BETAS + N_POSE_FEAT      # 217 (fused shapedirs+posedirs rows)
N_OUT_JOINTS = 44 + 17                    # joints44_17 (44 body + 17 h36m)
N_OUT_JOINTS_PAD = 64                     # lane padding of the joint output
PARAMS_NUM = 3 + 6 + 21 * 6 + 21          # 156

# Max tile along the 3*Vp (lane) axis of the blend kernel.  Per-step dirs block
# is ~217*tile*2 bytes bf16 (double-buffered).  Good ranges:
#   v7x: 4096-8192   v6e: 2048-4096   v5e: 1024-2048
BLEND_MAX_TILE = 4096

SMPL_PARENTS = [-1, 0, 0, 0, 1, 2, 3, 4, 5, 6, 7, 8,
                9, 9, 9, 12, 13, 14, 16, 17, 18, 19, 20, 21]


def _round_up(x, m):
    return ((x + m - 1) // m) * m


def _pick_tile(total, max_tile, align=128):
    """Largest multiple of `align` dividing `total`, <= max_tile, preferring a
    tiling with >= 2 grid steps (pipelined DMA + both v7x TensorCores fed)."""
    if total % align != 0:
        raise ValueError(f"lane axis ({total}) must be padded to a multiple of {align}")
    cands = [t for t in range(align, min(total, max_tile) + 1, align) if total % t == 0]
    multi = [t for t in cands if total // t >= 2]
    if multi:
        return max(multi)
    return max(cands) if cands else total


def _pick_batch_block(n, max_bb=8):
    """Largest divisor of n (<= max_bb) that still leaves >= 2 grid steps, so
    each A@W matmul has 16*bb MXU rows while v7x can still shard batches."""
    best = 1
    for bb in range(1, min(n, max_bb) + 1):
        if n % bb == 0 and n // bb >= 2:
            best = bb
    return best


# ============================== Pallas kernels ===============================
def pallas_blend(coef_bf16, dirs_bf16, v_template_f):
    """v_posed = v_template + [betas|pose_feat] @ [shapedirs;posedirs].

    All flat buffers are coordinate-major: column index = coord * Vp + vertex,
    so the (n, 3Vp) output reshapes for free to lane-dense (n, 3, Vp).
    Tiled over the 3Vp axis; the bf16 dirs reads are software-pipelined.
    """
    n, c = coef_bf16.shape
    v3 = v_template_f.shape[1]
    tile = _pick_tile(v3, BLEND_MAX_TILE)
    grid = (v3 // tile,)

    def kernel(coef_ref, dirs_ref, vt_ref, vp_ref):
        vp_ref[...] = vt_ref[...] + jnp.dot(coef_ref[...], dirs_ref[...],
                                            preferred_element_type=jnp.float32)

    return pl.pallas_call(
        kernel,
        out_shape=jax.ShapeDtypeStruct((n, v3), jnp.float32),
        grid=grid,
        in_specs=[
            pl.BlockSpec((n, c), lambda t: (0, 0)),          # resident (grid-invariant)
            pl.BlockSpec((c, tile), lambda t: (0, t)),       # streamed bf16 dirs
            pl.BlockSpec((1, tile), lambda t: (0, t)),       # f32 template
        ],
        out_specs=pl.BlockSpec((n, tile), lambda t: (0, t)),
        compiler_params=pltpu.CompilerParams(
            dimension_semantics=("parallel",),
            vmem_limit_bytes=32 * 1024 * 1024),
    )(coef_bf16, dirs_bf16, v_template_f)


def pallas_skin_regress(lbs_weights_t, a_flat, v_posed_cm, jre_t, cam=None):
    """Fused LBS skinning + extra joint regression (+ optional weak-persp proj).

      Tt (16*bb, Vp)   = A_flat block (16*bb, 24) @ W^T (24, Vp)     (one MXU call)
      verts_b (3, Vp)  : row r = Tt[16b+4r]*x + Tt[16b+4r+1]*y + Tt[16b+4r+2]*z + Tt[16b+4r+3]
      joints_b (3, 64) = verts_b @ J_extra^T (Vp, 64)
      pverts_b (3, Vp) = [x*s+tx, y*s+ty, z]   (cam from SMEM; camera pass only)
    """
    j, vp = lbs_weights_t.shape
    n = v_posed_cm.shape[0]
    jo = jre_t.shape[1]
    bb = _pick_batch_block(n)
    grid = (n // bb,)
    with_proj = cam is not None

    def kernel(*refs):
        if with_proj:
            cam_ref, w_ref, a_ref, vpo_ref, jre_ref, verts_ref, joints_ref, pverts_ref = refs
        else:
            w_ref, a_ref, vpo_ref, jre_ref, verts_ref, joints_ref = refs
        t = jnp.dot(a_ref[...], w_ref[...],
                    preferred_element_type=jnp.float32)              # (16*bb, Vp)
        jre = jre_ref[...]                                           # (Vp, 64)
        for b in range(bb):                                          # unrolled (small)
            vpo = vpo_ref[b]                                         # (3, Vp)
            x, y, z = vpo[0:1], vpo[1:2], vpo[2:3]                   # full-lane rows
            rows = []
            for r in range(3):
                base = 16 * b + 4 * r
                rows.append(t[base:base + 1] * x
                            + t[base + 1:base + 2] * y
                            + t[base + 2:base + 3] * z
                            + t[base + 3:base + 4])
            verts3 = jnp.concatenate(rows, axis=0)                   # (3, Vp)
            verts_ref[b] = verts3
            joints_ref[b] = jnp.dot(verts3, jre,
                                    preferred_element_type=jnp.float32)   # (3, 64)
            if with_proj:
                bg = pl.program_id(0) * bb + b
                s = cam_ref[bg, 0]
                tx = cam_ref[bg, 1]
                ty = cam_ref[bg, 2]
                pverts_ref[b] = jnp.concatenate(
                    [rows[0] * s + tx, rows[1] * s + ty, rows[2]], axis=0)

    in_specs = [
        pl.BlockSpec((j, vp), lambda b: (0, 0)),                     # W^T resident
        pl.BlockSpec((16 * bb, j), lambda b: (b, 0)),                # A block
        pl.BlockSpec((bb, 3, vp), lambda b: (b, 0, 0)),              # v_posed block
        pl.BlockSpec((vp, jo), lambda b: (0, 0)),                    # J_extra^T resident
    ]
    out_shapes = [jax.ShapeDtypeStruct((n, 3, vp), jnp.float32),
                  jax.ShapeDtypeStruct((n, 3, jo), jnp.float32)]
    out_specs = [pl.BlockSpec((bb, 3, vp), lambda b: (b, 0, 0)),
                 pl.BlockSpec((bb, 3, jo), lambda b: (b, 0, 0))]
    args = [lbs_weights_t, a_flat, v_posed_cm, jre_t]
    if with_proj:
        in_specs = [pl.BlockSpec((n, 3), lambda b: (0, 0),
                                 memory_space=pltpu.MemorySpace.SMEM)] + in_specs
        args = [cam] + args
        out_shapes.append(jax.ShapeDtypeStruct((n, 3, vp), jnp.float32))
        out_specs.append(pl.BlockSpec((bb, 3, vp), lambda b: (b, 0, 0)))

    return pl.pallas_call(
        kernel,
        out_shape=tuple(out_shapes),
        grid=grid,
        in_specs=in_specs,
        out_specs=tuple(out_specs),
        compiler_params=pltpu.CompilerParams(dimension_semantics=("parallel",)),
    )(*args)


# ================================ JAX glue ===================================
def rot6d_to_rotmat(x6):
    x = x6.reshape(-1, 3, 2)
    a1, a2 = x[:, :, 0], x[:, :, 1]
    b1 = a1 / jnp.linalg.norm(a1, axis=-1, keepdims=True)
    b2 = a2 - jnp.sum(b1 * a2, axis=-1, keepdims=True) * b1
    b2 = b2 / jnp.linalg.norm(b2, axis=-1, keepdims=True)
    b3 = jnp.cross(b1, b2)
    return jnp.stack([b1, b2, b3], axis=-1)


def rotmat_to_angle_axis(rmat):
    # TODO(synk): reference uses rotmat->quaternion->axis-angle; this trace-based
    # conversion matches it away from angle ~ 0 / pi edge cases.
    tr = rmat[:, 0, 0] + rmat[:, 1, 1] + rmat[:, 2, 2]
    cos = jnp.clip((tr - 1.0) * 0.5, -1.0 + 1e-7, 1.0 - 1e-7)
    angle = jnp.arccos(cos)
    sin = jnp.sin(angle)
    rx = rmat[:, 2, 1] - rmat[:, 1, 2]
    ry = rmat[:, 0, 2] - rmat[:, 2, 0]
    rz = rmat[:, 1, 0] - rmat[:, 0, 1]
    denom = jnp.where(jnp.abs(sin) < 1e-6, 1.0, 2.0 * sin)
    axis = jnp.stack([rx, ry, rz], axis=-1) / denom[:, None]
    return axis * angle[:, None]


def rot6D_to_angular(rot6d):
    n = rot6d.shape[0]
    rmat = rot6d_to_rotmat(rot6d.reshape(-1, 6))
    return rotmat_to_angle_axis(rmat).reshape(n, -1)


def batch_rodrigues(rot_vecs, eps=1e-8):
    angle = jnp.linalg.norm(rot_vecs + eps, axis=1, keepdims=True)
    rot_dir = rot_vecs / angle
    cos = jnp.cos(angle)[:, :, None]
    sin = jnp.sin(angle)[:, :, None]
    rx, ry, rz = rot_dir[:, 0], rot_dir[:, 1], rot_dir[:, 2]
    zeros = jnp.zeros_like(rx)
    k = jnp.stack([zeros, -rz, ry, rz, zeros, -rx, -ry, rx, zeros],
                  axis=1).reshape(-1, 3, 3)
    ident = jnp.eye(3, dtype=rot_vecs.dtype)[None]
    return ident + sin * k + (1.0 - cos) * jnp.matmul(k, k)


def batch_rigid_transform(rot_mats, joints, parents):
    # Inherently sequential 24-joint kinematic chain -> plain JAX.
    n, k = joints.shape[:2]
    par = np.asarray(parents)
    rel_joints = joints.at[:, 1:].add(-joints[:, par[1:]])
    tm = jnp.concatenate([rot_mats, rel_joints[..., None]], axis=-1)      # (N,K,3,4)
    bottom = jnp.tile(jnp.array([0., 0., 0., 1.], jnp.float32).reshape(1, 1, 1, 4),
                      (n, k, 1, 1))
    tm = jnp.concatenate([tm, bottom], axis=2)                            # (N,K,4,4)
    chain = [tm[:, 0]]
    for i in range(1, k):
        chain.append(jnp.matmul(chain[par[i]], tm[:, i]))
    transforms = jnp.stack(chain, axis=1)                                 # (N,K,4,4)
    joints_h = jnp.concatenate([joints, jnp.zeros((n, k, 1), jnp.float32)], axis=-1)
    tj = jnp.einsum('nkij,nkj->nki', transforms, joints_h)                # (N,K,4)
    rel = transforms - jnp.concatenate(
        [jnp.zeros((n, k, 4, 3), jnp.float32), tj[..., None]], axis=-1)
    return rel


def smpl_forward(betas, poses, smpl, shared=None, cam=None):
    """Returns (verts_cm (N,3,Vp), joints61_cm (N,3,61), proj_verts_cm|None, shared).

    `shared` carries (v_posed_cm, j_rest): betas + body pose are identical
    between the camera and world passes (only the global orientation differs),
    so the blend-shape and rest-joint results can be reused exactly.
    When `cam` is given, the weak-perspective vertex projection is fused into
    the skin kernel and returned as proj_verts_cm.
    """
    n = betas.shape[0]
    vp_pad = smpl['n_verts_pad']
    rot_mats = batch_rodrigues(poses.reshape(-1, 3)).reshape(n, N_JOINTS, 3, 3)

    if shared is None:
        ident = jnp.eye(3, dtype=jnp.float32)
        pose_feature = (rot_mats[:, 1:] - ident).reshape(n, N_POSE_FEAT)
        coef = jnp.concatenate([betas, pose_feature], axis=1).astype(jnp.bfloat16)
        v_posed_f = pallas_blend(coef, smpl['dirs_f'], smpl['v_template_f'])
        v_posed_cm = v_posed_f.reshape(n, 3, vp_pad)                  # free reshape
        # rest joints: exact f32, folded offline (no v_shaped / regress kernel)
        j_rest = smpl['J0'][None] + jnp.einsum('nk,kjc->njc', betas, smpl['Jsd'])
        shared = (v_posed_cm, j_rest)
    else:
        v_posed_cm, j_rest = shared

    a_rel = batch_rigid_transform(rot_mats, j_rest, SMPL_PARENTS)         # (N,24,4,4)
    a_flat = jnp.transpose(a_rel.reshape(n, N_JOINTS, 16),
                           (0, 2, 1)).reshape(n * 16, N_JOINTS)           # (16N,24)
    outs = pallas_skin_regress(smpl['lbs_weights_t'], a_flat, v_posed_cm,
                               smpl['J_regressor_extra_t'], cam=cam)
    if cam is not None:
        verts_cm, joints_cm, pverts_cm = outs
    else:
        (verts_cm, joints_cm), pverts_cm = outs, None
    return verts_cm, joints_cm[:, :, :N_OUT_JOINTS], pverts_cm, shared


def parse_age_cls_results(kid_offsets):
    return jnp.where(kid_offsets <= 0.8, 0,
                     jnp.where(kid_offsets <= 0.9, 1,
                               jnp.where(kid_offsets <= 1.0, 2, 3))).astype(jnp.int32)


def convert_cam_to_3d_trans(cams, weight=2.0):
    s, tx, ty = cams[:, 0], cams[:, 1], cams[:, 2]
    depth, dx, dy = 1.0 / s, tx / s, ty / s
    return jnp.stack([dx, dy, depth], axis=1) * weight


def convert_kp2d_from_input_to_orgimg(kp2ds, offsets):
    img_pad_size = offsets[:, :2]
    crop_trbl = offsets[:, 2:6]
    pad_trbl = offsets[:, 6:10]
    left_top = jnp.stack([crop_trbl[:, 3] - pad_trbl[:, 3],
                          crop_trbl[:, 0] - pad_trbl[:, 0]], axis=1)
    out = (kp2ds[:, :, :2] + 1.0) * img_pad_size[:, None] / 2.0 + left_top[:, None]
    if kp2ds.shape[-1] == 3:
        depth = (kp2ds[:, :, 2:3] + 1.0) * img_pad_size[:, None, 0:1] / 2.0
        out = jnp.concatenate([out, depth], axis=-1)
    return out


def project_points_cm(pts_cm, cam):
    """Weak-perspective projection on lane-dense points (N, 3, P) in plain JAX.
    ROMP ordering: X*s + t (not (X+t)*s); z passes through."""
    s = cam[:, 0][:, None, None]
    t = cam[:, 1:3][:, :, None]
    return jnp.concatenate([pts_cm[:, :2] * s + t, pts_cm[:, 2:3]], axis=1)


# ============================ SMPLWrapper forward ============================
def pack_params_dict(params_pred):
    part_idx = [3, 6, 21 * 6, 21]
    names = ['cam', 'global_orient', 'body_pose', 'smpl_betas']
    idx_list, d = [0], {}
    for i, (idx, name) in enumerate(zip(part_idx, names)):
        idx_list.append(idx_list[i] + idx)
        d[name] = params_pred[:, idx_list[i]:idx_list[i + 1]]
    d['body_pose'] = rot6D_to_angular(d['body_pose'])          # (N,63)
    d['global_orient'] = rot6D_to_angular(d['global_orient'])  # (N,3)
    n = d['body_pose'].shape[0]
    d['body_pose'] = jnp.concatenate(
        [d['body_pose'], jnp.zeros((n, 6), jnp.float32)], axis=1)   # (N,69)
    d['smpl_thetas'] = jnp.concatenate(
        [d['global_orient'], d['body_pose']], axis=1)               # (N,72)
    return d


def process_betas(betas_pred):
    # NOTE: mirrors the reference exactly -- the kid-offset column is zeroed
    # BEFORE it is read, so kid_offsets_pred is 0 and Age_preds is class 0.
    betas_pred = betas_pred.at[:, 10].set(0.0)
    kid_offsets = betas_pred[:, 10]
    age_preds = parse_age_cls_results(kid_offsets)
    cls_dict = {'Age_preds': age_preds, 'kid_offsets_pred': kid_offsets}
    return betas_pred[:, :10], cls_dict


def smpl_wrapper_forward(outputs, meta_data, smpl, calc_pj2d_org=True):
    outputs = dict(outputs)
    offsets = meta_data['offsets'] if calc_pj2d_org else None
    V = smpl['n_verts']

    params_dict = pack_params_dict(outputs['params_pred'])
    params_dict['smpl_betas'], cls_dict = process_betas(params_dict['smpl_betas'])
    cam = params_dict['cam']

    # Camera pass: vertex projection under `cam` fused into the skin kernel.
    verts_cm, joints61_cm, pverts_cm, shared = smpl_forward(
        params_dict['smpl_betas'], params_dict['smpl_thetas'], smpl, cam=cam)
    j3d_cm = joints61_cm[:, :, :44]
    h36m17_cm = joints61_cm[:, :, 44:]

    outputs.update({'verts': jnp.transpose(verts_cm[:, :, :V], (0, 2, 1)),
                    'j3d': jnp.transpose(j3d_cm, (0, 2, 1)),
                    'joints_h36m17': jnp.transpose(h36m17_cm, (0, 2, 1)),
                    **params_dict, **cls_dict})

    world_j3d_cm = None
    if 'world_global_rots' in outputs:
        world_poses = jnp.concatenate(
            [outputs['world_global_rots'], params_dict['smpl_thetas'][:, 3:]], axis=1)
        w_verts_cm, w_joints61_cm, _, _ = smpl_forward(
            params_dict['smpl_betas'], world_poses, smpl, shared=shared)
        world_j3d_cm = w_joints61_cm[:, :, :44]
        outputs.update({
            'world_verts': jnp.transpose(w_verts_cm[:, :, :V], (0, 2, 1)),
            'world_j3d': jnp.transpose(world_j3d_cm, (0, 2, 1)),
            'world_joints_h36m17': jnp.transpose(w_joints61_cm[:, :, 44:], (0, 2, 1)),
        })

    # Camera-frame projection outputs (joints are tiny -> plain JAX; vertices
    # come pre-projected from the fused skin kernel).
    pjoints = project_points_cm(joints61_cm, cam)
    pj2d = jnp.transpose(pjoints[:, :2, :44], (0, 2, 1))
    pj2d_h36m17 = jnp.transpose(pjoints[:, :2, 44:], (0, 2, 1))
    verts_camed = jnp.transpose(pverts_cm[:, :, :V], (0, 2, 1))
    proj_out = {'pj2d': pj2d, 'cam_trans': convert_cam_to_3d_trans(cam),
                'pj2d_h36m17': pj2d_h36m17, 'verts_camed': verts_camed}
    if offsets is not None:
        proj_out['pj2d_org'] = convert_kp2d_from_input_to_orgimg(pj2d, offsets)
        proj_out['pj2d_org_h36m17'] = convert_kp2d_from_input_to_orgimg(
            pj2d_h36m17, offsets)
        proj_out['verts_camed_org'] = convert_kp2d_from_input_to_orgimg(
            verts_camed, offsets)
    outputs.update(proj_out)

    # World (dynamic) projection path: world j3d under world_cams, but the
    # camera-frame h36m17 joints and vertices (same semantics as reference),
    # guarded so it cannot KeyError when the world inputs are absent.
    if world_j3d_cm is not None and 'world_cams' in outputs:
        wcam = outputs['world_cams']
        wp_j3d = project_points_cm(world_j3d_cm, wcam)
        wp_h36m = project_points_cm(h36m17_cm, wcam)
        world_updates = {
            'world_pj2d': jnp.transpose(wp_j3d[:, :2], (0, 2, 1)),
            'world_trans': convert_cam_to_3d_trans(wcam),
            'world_joints_h36m17': jnp.transpose(wp_h36m[:, :2], (0, 2, 1)),
        }
        if offsets is not None:
            wverts_camed = jnp.transpose(
                project_points_cm(verts_cm, wcam)[:, :, :V], (0, 2, 1))
            world_updates['world_verts_camed_org'] = convert_kp2d_from_input_to_orgimg(
                wverts_camed, offsets)
        outputs.update(world_updates)
    return outputs


# ============================ synthetic parameters ===========================
def build_synthetic_smpl(key):
    ks = jax.random.split(key, 6)
    v_template = jax.random.normal(ks[0], (N_VERTS, 3), jnp.float32) * 0.1
    shapedirs = jax.random.normal(ks[1], (N_VERTS, 3, N_BETAS), jnp.float32) * 0.01
    posedirs = jax.random.normal(ks[2], (N_POSE_FEAT, 3, N_VERTS), jnp.float32) * 1e-3
    jr = jax.random.uniform(ks[3], (N_JOINTS, N_VERTS), jnp.float32)
    j_regressor = jr / jr.sum(axis=-1, keepdims=True)
    jre = jax.random.uniform(ks[4], (N_OUT_JOINTS, N_VERTS), jnp.float32)
    j_regressor_extra = jre / jre.sum(axis=-1, keepdims=True)
    lbs_weights = jax.nn.softmax(
        jax.random.normal(ks[5], (N_VERTS, N_JOINTS), jnp.float32) * 2.0, axis=-1)

    vp = _round_up(N_VERTS, 128)
    def pad_v(a):  # zero-pad the trailing vertex axis V -> Vp
        return jnp.pad(a, [(0, 0)] * (a.ndim - 1) + [(0, vp - a.shape[-1])])

    # Coordinate-major ("cm") padded layouts: flat column = coord * Vp + vertex,
    # so the (n, 3Vp) blend output reshapes for free into lane-dense (n, 3, Vp).
    v_template_f = pad_v(v_template.T).reshape(1, 3 * vp)                      # f32
    shapedirs_cm = pad_v(jnp.transpose(shapedirs, (2, 1, 0)))                  # (10,3,Vp)
    posedirs_cm = pad_v(posedirs)                                              # (207,3,Vp)
    dirs_f = jnp.concatenate([shapedirs_cm, posedirs_cm], axis=0).reshape(
        N_BLEND_ROWS, 3 * vp).astype(jnp.bfloat16)                             # (217,3Vp)

    # Rest-joint regression folded offline (exact f32): j_rest = J0 + betas @ Jsd
    j0 = j_regressor @ v_template                                              # (24,3)
    jsd = jnp.einsum('jv,vck->kjc', j_regressor, shapedirs)                    # (10,24,3)

    # Skinning operands (f32 on purpose: one-time/resident DMAs; keeps mm accuracy)
    lbs_weights_t = pad_v(lbs_weights.T)                                       # (24,Vp)
    jre_t = jnp.pad(pad_v(j_regressor_extra),
                    [(0, N_OUT_JOINTS_PAD - N_OUT_JOINTS), (0, 0)]).T          # (Vp,64)

    return {
        'dirs_f': dirs_f,
        'v_template_f': v_template_f,
        'J0': j0, 'Jsd': jsd,
        'lbs_weights_t': lbs_weights_t,
        'J_regressor_extra_t': jre_t,
        'n_verts': N_VERTS, 'n_verts_pad': vp,
        '_raw': {'v_template': v_template, 'shapedirs': shapedirs,
                 'posedirs': posedirs, 'J_regressor': j_regressor,
                 'J_regressor_extra': j_regressor_extra, 'lbs_weights': lbs_weights},
    }


def smpl_reference_jax(betas, poses, raw):
    """Dense f32 reference SMPL forward (no padding, no bf16) for validation."""
    n = betas.shape[0]
    v = raw['v_template'].shape[0]
    v_shaped = raw['v_template'][None] + jnp.einsum('vck,nk->nvc', raw['shapedirs'], betas)
    j_rest = jnp.einsum('jv,nvc->njc', raw['J_regressor'], v_shaped)
    rot_mats = batch_rodrigues(poses.reshape(-1, 3)).reshape(n, N_JOINTS, 3, 3)
    pose_feat = (rot_mats[:, 1:] - jnp.eye(3, dtype=jnp.float32)).reshape(n, N_POSE_FEAT)
    v_posed = v_shaped + jnp.einsum('np,pcv->nvc', pose_feat, raw['posedirs'])
    a_rel = batch_rigid_transform(rot_mats, j_rest, SMPL_PARENTS)
    t_full = jnp.einsum('vj,njab->nvab', raw['lbs_weights'], a_rel)
    vh = jnp.concatenate([v_posed, jnp.ones((n, v, 1), jnp.float32)], axis=-1)
    verts = jnp.einsum('nvab,nvb->nva', t_full, vh)[..., :3]
    joints61 = jnp.einsum('jv,nvc->njc', raw['J_regressor_extra'], verts)
    return verts, joints61


if __name__ == "__main__":
    root = jax.random.PRNGKey(0)
    k_smpl, k_params, k_wrot, k_wcam = jax.random.split(root, 4)

    smpl = build_synthetic_smpl(k_smpl)

    params_pred = jax.random.normal(k_params, (N_BATCH, PARAMS_NUM), jnp.float32) * 0.5
    world_global_rots = jax.random.normal(k_wrot, (N_BATCH, 3), jnp.float32) * 0.3
    world_cams = jnp.abs(jax.random.normal(k_wcam, (N_BATCH, 3), jnp.float32)) * 0.5 + 0.5

    outputs_in = {'params_pred': params_pred,
                  'world_global_rots': world_global_rots,
                  'world_cams': world_cams}
    offsets = jnp.tile(
        jnp.array([[256., 256., 10., 0., 10., 0., 0., 0., 0., 0.]], jnp.float32),
        (N_BATCH, 1))
    meta_data = {'offsets': offsets}

    out = smpl_wrapper_forward(outputs_in, meta_data, smpl, calc_pj2d_org=True)
    out = jax.block_until_ready(out)

    # shape sanity checks
    assert out['verts'].shape == (N_BATCH, N_VERTS, 3)
    assert out['j3d'].shape == (N_BATCH, 44, 3)
    assert out['joints_h36m17'].shape == (N_BATCH, 17, 3)
    assert out['smpl_thetas'].shape == (N_BATCH, 72)
    assert out['pj2d'].shape == (N_BATCH, 44, 2)
    assert out['verts_camed'].shape == (N_BATCH, N_VERTS, 3)
    assert out['world_verts'].shape == (N_BATCH, N_VERTS, 3)
    assert out['world_pj2d'].shape == (N_BATCH, 44, 2)
    assert out['world_verts_camed_org'].shape == (N_BATCH, N_VERTS, 3)

    # numerical check against a dense f32 plain-JAX SMPL reference
    ref_verts, ref_j61 = smpl_reference_jax(out['smpl_betas'], out['smpl_thetas'],
                                            smpl['_raw'])
    np.testing.assert_allclose(np.asarray(out['verts']), np.asarray(ref_verts),
                               atol=3e-3, rtol=0)
    np.testing.assert_allclose(np.asarray(out['j3d']), np.asarray(ref_j61[:, :44]),
                               atol=3e-3, rtol=0)
    assert bool(jnp.all(jnp.isfinite(out['verts'])))
    print("KERNEL_OK")
</pallas_src>

<mosaic_0001>
module attributes {stable_mosaic.version = 11 : i64} {
  func.func @kernel(%arg0: i32, %arg1: memref<2x217xbf16, #tpu.memory_space<vmem>>, %arg2: memref<217x768xbf16, #tpu.memory_space<vmem>>, %arg3: memref<1x768xf32, #tpu.memory_space<vmem>>, %arg4: memref<2x768xf32, #tpu.memory_space<vmem>>) attributes {dimension_semantics = [#tpu.dimension_semantics<parallel>], iteration_bounds = array<i64: 2>, scalar_prefetch = 0 : i64, scratch_operands = 0 : i64, tpu.core_type = #tpu.core_type<tc>, window_params = [{pipeline_mode = #tpu.pipeline_mode<synchronous>, transform_indices = @transform_0, window_bounds = array<i64: 2, 217>}, {transform_indices = @transform_1, window_bounds = array<i64: 217, 768>}, {transform_indices = @transform_2, window_bounds = array<i64: 1, 768>}, {transform_indices = @transform_3, window_bounds = array<i64: 2, 768>}]} {
    %c0 = arith.constant 0 : index
    %c0_0 = arith.constant 0 : index
    %0 = vector.load %arg3[%c0, %c0_0] : memref<1x768xf32, #tpu.memory_space<vmem>>, vector<1x768xf32>
    %c0_1 = arith.constant 0 : index
    %c0_2 = arith.constant 0 : index
    %1 = vector.load %arg1[%c0_1, %c0_2] : memref<2x217xbf16, #tpu.memory_space<vmem>>, vector<2x217xbf16>
    %c0_3 = arith.constant 0 : index
    %c0_4 = arith.constant 0 : index
    %2 = vector.load %arg2[%c0_3, %c0_4] : memref<217x768xbf16, #tpu.memory_space<vmem>>, vector<217x768xbf16>
    %cst = arith.constant dense<0.000000e+00> : vector<2x768xf32>
    %3 = tpu.matmul %1, %2, %cst {dimension_numbers = #tpu.dot_dimension_numbers<[1], [0], [0], [1], [0, 0, 1, 1], [], []>} : vector<2x217xbf16>, vector<217x768xbf16>, vector<2x768xf32> -> vector<2x768xf32>
    %4 = vector.broadcast %0 : vector<1x768xf32> to vector<2x768xf32>
    %5 = arith.addf %4, %3 : vector<2x768xf32>
    %c0_5 = arith.constant 0 : index
    %c0_6 = arith.constant 0 : index
    %6 = vector.load %arg4[%c0_5, %c0_6] : memref<2x768xf32, #tpu.memory_space<vmem>>, vector<2x768xf32>
    tpu.vector_store %arg4[%c0_5, %c0_6], %5 {strides = array<i32>} : memref<2x768xf32, #tpu.memory_space<vmem>>, vector<2x768xf32>,
    return
  }
  func.func @transform_0(%arg0: i32) -> (i32, i32) {
    %c0_i32 = arith.constant 0 : i32
    %c0_i32_0 = arith.constant 0 : i32
    %c0_i32_1 = arith.constant 0 : i32
    return %c0_i32, %c0_i32_0 : i32, i32
  }
  func.func @transform_1(%arg0: i32) -> (i32, i32) {
    %c0_i32 = arith.constant 0 : i32
    %c0_i32_0 = arith.constant 0 : i32
    return %c0_i32, %arg0 : i32, i32
  }
  func.func @transform_2(%arg0: i32) -> (i32, i32) {
    %c0_i32 = arith.constant 0 : i32
    %c0_i32_0 = arith.constant 0 : i32
    return %c0_i32, %arg0 : i32, i32
  }
  func.func @transform_3(%arg0: i32) -> (i32, i32) {
    %c0_i32 = arith.constant 0 : i32
    %c0_i32_0 = arith.constant 0 : i32
    return %c0_i32, %arg0 : i32, i32
  }
}

</mosaic_0001>

<llo_original>
// kernel: tpu_custom_call.1
$region0: #{tpu_custom_call.1}
  #allocation0 [shape = 'u32[]', space=smem, size = 0x4, offset = 0x4, fixed_abs, tag = 'smem constant byte address 0x4 - core index']
  #allocation1 [shape = 'u32[144,128]{1,0:T(1,128)}', space=vmem, size = 0x12000, scoped, tag = 'internal scratch']
  %s0 = inlined_call_operand.hbm [shape: bf16[2,217], index: 0, kind: input, shape index: {}]
  %s1 = inlined_call_operand.hbm [shape: bf16[217,1536], index: 1, kind: input, shape index: {}]
  %s2 = inlined_call_operand.hbm [shape: f32[1,1536], index: 2, kind: input, shape index: {}]
  %s3 = inlined_call_operand.hbm [shape: f32[2,1536], index: 3, kind: output, shape index: {}]
  %s4 = sld [smem:[#allocation0]]
  $region57: #{tpu_custom_call.1} parent=0
    _
  %s6 = ssub.s32 1, %s4
  %s7 = scalar_select 0, %s6, %s4
  $region1: #{tpu_custom_call.1} parent=0
    #allocation2 [shape = 'u8[1024]{0}', space=vmem, size = 0x400, scoped, tag = 'input window, operand 0, single buffered']
    #allocation3 [shape = 's32[2]{0}', space=sflag, size = 0x8, scoped, tag = 'scoped memory for tpu_custom_call.1']
    #allocation4 [shape = 's32[2]{0}', space=sflag, size = 0x8, scoped, tag = 'scoped memory for tpu_custom_call.1']
    #allocation5 [shape = 'u8[688128]{0}', space=vmem, size = 0xa8000, scoped, tag = 'input window, operand 1']
    #allocation6 [shape = 's32[2]{0}', space=sflag, size = 0x8, scoped, tag = 'scoped memory for tpu_custom_call.1']
    #allocation7 [shape = 'u8[6144]{0}', space=vmem, size = 0x1800, scoped, tag = 'input window, operand 2']
    #allocation8 [shape = 'u8[12288]{0}', space=vmem, size = 0x3000, scoped, tag = 'output window, operand 0']
    %8 = vsyncpa [#allocation3], 0
    %9 = vsyncpa [#allocation6], 0
    %s10 = scalar_lea.sflag [#allocation6], 1
    %11 = vsyncpa %s10, 0
    %12 = vsyncpa [#allocation4], 0
    %s13 = scalar_lea.sflag [#allocation4], 1
    %14 = vsyncpa %s13, 0
    loop: start=0, step=1, limit=4
    $region2: #{tpu_custom_call.1} parent=1 // loop_pre_header
      _
    $region3: #{tpu_custom_call.1} parent=1 // loop_header
      %s16 = sphi 0, %s20
      %p17 = scmp.ge.s32.totalorder %s16, 4
      %s24 = sphi 0, %s24
      %s26 = sphi 0, %s24
      %s27 = sphi 0, %s26
      %s41 = sphi 0, %s27
      %s47 = sphi 0, %s49
      %s50 = sphi 0, %s47
      %s51 = sphi 0, %s50
      %s67 = sphi 0, %s51
      %s73 = sphi 0, %s75
      %s76 = sphi 0, %s73
      %s77 = sphi 0, %s76
      %s93 = sphi 0, %s77
      %s99 = sphi 0, %s101
      %s102 = sphi 0, %s99
      %s103 = sphi 0, %s102
      %s119 = sphi 0, %s103
    $region4: #{tpu_custom_call.1} parent=1 // loop_header_branch
      %19 = sbr.rel (%p17) target = $region8
    $region5: #{tpu_custom_call.1} parent=1 // loop_body
      %s21 = ssub.s32 %s16, 1
      %s22 = ssub.s32 %s16, 2
      %s23 = sadd.s32 %s16, 1
      %s25 = sadd.s32 %s24, 1
      %p28 = scmp.eq.s32.totalorder %s16, 1
      %p29 = scmp.ne.s32.totalorder %s24, %s26
      %p30 = scmp.eq.s32.totalorder %s16, 0
      %p31 = por %p29, %p30
      %p32 = scmp.ne.s32.totalorder %s24, %s26
      %p33 = scmp.eq.s32.totalorder %s21, 1
      %p34 = por %p32, %p33
      %p35 = scmp.ne.s32.totalorder %s26, %s27
      %p36 = scmp.eq.s32.totalorder %s21, 0
      %p37 = por %p35, %p36
      %p38 = scmp.ne.s32.totalorder %s26, %s27
      %p39 = scmp.eq.s32.totalorder %s22, 1
      %p40 = por %p38, %p39
      %p42 = scmp.ne.s32.totalorder %s27, %s41
      %p43 = scmp.eq.s32.totalorder %s22, 0
      %p44 = por %p42, %p43
      %s45 = ssub.s32 %s16, %s23
      %p46 = scmp.eq.s32.totalorder %s45, 0
      %s48 = sadd.s32 %s47, 1
      %s49 = scalar_select %p46, %s47, %s48
      %p52 = pneg %p46
      %p53 = scmp.eq.s32.totalorder %s16, 1
      %p54 = por %p52, %p53
      %p55 = scmp.ne.s32.totalorder %s47, %s50
      %p56 = scmp.eq.s32.totalorder %s16, 0
      %p57 = por %p55, %p56
      %p58 = scmp.ne.s32.totalorder %s47, %s50
      %p59 = scmp.eq.s32.totalorder %s21, 1
      %p60 = por %p58, %p59
      %p61 = scmp.ne.s32.totalorder %s50, %s51
      %p62 = scmp.eq.s32.totalorder %s21, 0
      %p63 = por %p61, %p62
      %p64 = scmp.ne.s32.totalorder %s50, %s51
      %p65 = scmp.eq.s32.totalorder %s22, 1
      %p66 = por %p64, %p65
      %p68 = scmp.ne.s32.totalorder %s51, %s67
      %p69 = scmp.eq.s32.totalorder %s22, 0
      %p70 = por %p68, %p69
      %s71 = ssub.s32 %s16, %s23
      %p72 = scmp.eq.s32.totalorder %s71, 0
      %s74 = sadd.s32 %s73, 1
      %s75 = scalar_select %p72, %s73, %s74
      %p78 = pneg %p72
      %p79 = scmp.eq.s32.totalorder %s16, 1
      %p80 = por %p78, %p79
      %p81 = scmp.ne.s32.totalorder %s73, %s76
      %p82 = scmp.eq.s32.totalorder %s16, 0
      %p83 = por %p81, %p82
      %p84 = scmp.ne.s32.totalorder %s73, %s76
      %p85 = scmp.eq.s32.totalorder %s21, 1
      %p86 = por %p84, %p85
      %p87 = scmp.ne.s32.totalorder %s76, %s77
      %p88 = scmp.eq.s32.totalorder %s21, 0
      %p89 = por %p87, %p88
      %p90 = scmp.ne.s32.totalorder %s76, %s77
      %p91 = scmp.eq.s32.totalorder %s22, 1
      %p92 = por %p90, %p91
      %p94 = scmp.ne.s32.totalorder %s77, %s93
      %p95 = scmp.eq.s32.totalorder %s22, 0
      %p96 = por %p94, %p95
      %s97 = ssub.s32 %s16, %s23
      %p98 = scmp.eq.s32.totalorder %s97, 0
      %s100 = sadd.s32 %s99, 1
      %s101 = scalar_select %p98, %s99, %s100
      %p104 = pneg %p98
      %p105 = scmp.eq.s32.totalorder %s16, 1
      %p106 = por %p104, %p105
      %p107 = scmp.ne.s32.totalorder %s99, %s102
      %p108 = scmp.eq.s32.totalorder %s16, 0
      %p109 = por %p107, %p108
      %p110 = scmp.ne.s32.totalorder %s99, %s102
      %p111 = scmp.eq.s32.totalorder %s21, 1
      %p112 = por %p110, %p111
      %p113 = scmp.ne.s32.totalorder %s102, %s103
      %p114 = scmp.eq.s32.totalorder %s21, 0
      %p115 = por %p113, %p114
      %p116 = scmp.ne.s32.totalorder %s102, %s103
      %p117 = scmp.eq.s32.totalorder %s22, 1
      %p118 = por %p116, %p117
      %p120 = scmp.ne.s32.totalorder %s103, %s119
      %p121 = scmp.eq.s32.totalorder %s22, 0
      %p122 = por %p120, %p121
      %p123 = scmp.le.s32.totalorder 1, %s16
      %p124 = scmp.lt.s32.totalorder %s16, 3
      %p125 = pnand %p123, %p124
      %p126 = pneg %p125
      // Predicated region
      $region9: #{tpu_custom_call.1} parent=5 // pred_check
        _
      $region10: #{tpu_custom_call.1} parent=5 // pred_check_branch
        %128 = sbr.rel (%p125) target = $region12
      $region11: #{tpu_custom_call.1} parent=5 // pred_region
        %s129 = ssub.s32 %s16, 1
        // Predicated region
        $region13: #{tpu_custom_call.1} parent=11 // pred_check
          %p130 = pneg %p37
        $region14: #{tpu_custom_call.1} parent=11 // pred_check_branch
          %132 = sbr.rel (%p130) target = $region16
        $region15: #{tpu_custom_call.1} parent=11 // pred_region
          %s134 = ssub.s32 32, 32
          %135 = vsyncadd [#allocation3], %s134
          %s137 = sshll.u32 [#allocation2], 4
          %s138 = int_to_ptr.vmem [resolvable:$true] %s137
          %140 = dma.hbm_to_vmem [thread:$0]  %s0, 32, %s138, [#allocation3]
        $region16: #{tpu_custom_call.1} parent=11 // pred_fallthru
          _
      $region12: #{tpu_custom_call.1} parent=5 // pred_fallthru
        _
      %p141 = scmp.lt.s32.totalorder %s16, 2
      // Predicated region
      $region17: #{tpu_custom_call.1} parent=5 // pred_check
        %p142 = pneg %p141
      $region18: #{tpu_custom_call.1} parent=5 // pred_check_branch
        %144 = sbr.rel (%p142) target = $region20
      $region19: #{tpu_custom_call.1} parent=5 // pred_region
        // Predicated region
        $region21: #{tpu_custom_call.1} parent=19 // pred_check
          %p145 = pneg %p57
        $region22: #{tpu_custom_call.1} parent=19 // pred_check_branch
          %147 = sbr.rel (%p145) target = $region24
        $region23: #{tpu_custom_call.1} parent=19 // pred_region
          %s148 = sand.u32 %s16, 1
          %s149 = scalar_lea.sflag [#allocation6], %s148
          %s150 = sand.u32 %s47, 1
          %s151 = smul.addr %s150, 672
          %s152 = scalar_lea.vmem [#allocation5], %s151
          %s153 = smul.u32 6, %s16
          %s155 = ssub.s32 10752, 10752
          %156 = vsyncadd %s149, %s155
          %s157 = smul.addr %s153, 64
          %s158 = scalar_lea.hbm %s1, %s157
          %s159 = sshll.u32 %s152, 4
          %s160 = int_to_ptr.vmem [resolvable:$true] %s159
          %165 = dma.hbm_to_vmem [thread:$0]  %s158, 10752, %s160, %s149, 768, 384, 24
        $region24: #{tpu_custom_call.1} parent=19 // pred_fallthru
          _
        // Predicated region
        $region25: #{tpu_custom_call.1} parent=19 // pred_check
          %p166 = pneg %p83
        $region26: #{tpu_custom_call.1} parent=19 // pred_check_branch
          %168 = sbr.rel (%p166) target = $region28
        $region27: #{tpu_custom_call.1} parent=19 // pred_region
          %s169 = sand.u32 %s16, 1
          %s170 = scalar_lea.sflag [#allocation6], %s169
          %s171 = sand.u32 %s73, 1
          %s172 = smul.addr %s171, 6
          %s173 = scalar_lea.vmem [#allocation7], %s172
          %s174 = smul.u32 6, %s16
          %s176 = ssub.s32 96, 96
          %177 = vsyncadd %s170, %s176
          %s178 = smul.addr %s174, 16
          %s179 = scalar_lea.hbm %s2, %s178
          %s181 = sshll.u32 %s173, 4
          %s182 = int_to_ptr.vmem [resolvable:$true] %s181
          %184 = dma.hbm_to_vmem [thread:$0]  %s179, 96, %s182, %s170
        $region28: #{tpu_custom_call.1} parent=19 // pred_fallthru
          _
      $region20: #{tpu_custom_call.1} parent=5 // pred_fallthru
        _
      %p185 = scmp.le.s32.totalorder 1, %s16
      %p186 = scmp.lt.s32.totalorder %s16, 3
      %p187 = pnand %p185, %p186
      %p188 = pneg %p187
      // Predicated region
      $region29: #{tpu_custom_call.1} parent=5 // pred_check
        _
      $region30: #{tpu_custom_call.1} parent=5 // pred_check_branch
        %190 = sbr.rel (%p187) target = $region32
      $region31: #{tpu_custom_call.1} parent=5 // pred_region
        %s191 = ssub.s32 %s16, 1
        // Predicated region
        $region33: #{tpu_custom_call.1} parent=31 // pred_check
          %p192 = pneg %p37
        $region34: #{tpu_custom_call.1} parent=31 // pred_check_branch
          %194 = sbr.rel (%p192) target = $region36
        $region35: #{tpu_custom_call.1} parent=31 // pred_region
          %195 = dma.done [#allocation3], 32
        $region36: #{tpu_custom_call.1} parent=31 // pred_fallthru
          _
        %s196 = sand.u32 %s21, 1
        %s197 = scalar_lea.sflag [#allocation6], %s196
        %s198 = sand.u32 %s50, 1
        %s199 = smul.addr %s198, 672
        %s200 = scalar_lea.vmem [#allocation5], %s199
        // Predicated region
        $region37: #{tpu_custom_call.1} parent=31 // pred_check
          %p201 = pneg %p63
        $region38: #{tpu_custom_call.1} parent=31 // pred_check_branch
          %203 = sbr.rel (%p201) target = $region40
        $region39: #{tpu_custom_call.1} parent=31 // pred_region
          %204 = dma.done %s197, 10752
        $region40: #{tpu_custom_call.1} parent=31 // pred_fallthru
          _
        %s205 = sand.u32 %s21, 1
        %s206 = scalar_lea.sflag [#allocation6], %s205
        %s207 = sand.u32 %s76, 1
        %s208 = smul.addr %s207, 6
        %s209 = scalar_lea.vmem [#allocation7], %s208
        // Predicated region
        $region41: #{tpu_custom_call.1} parent=31 // pred_check
          %p210 = pneg %p89
        $region42: #{tpu_custom_call.1} parent=31 // pred_check_branch
          %212 = sbr.rel (%p210) target = $region44
        $region43: #{tpu_custom_call.1} parent=31 // pred_region
          %213 = dma.done %s206, 96
        $region44: #{tpu_custom_call.1} parent=31 // pred_fallthru
          _
        %p214 = pneg %p37
        %p215 = pneg %p34
        %s216 = sand.u32 %s21, 1
        %s217 = scalar_lea.sflag [#allocation6], %s216
        %s218 = sand.u32 %s50, 1
        %s219 = smul.addr %s218, 672
        %s220 = scalar_lea.vmem [#allocation5], %s219
        %p221 = pneg %p63
        %p222 = pneg %p60
        %s223 = sand.u32 %s21, 1
        %s224 = scalar_lea.sflag [#allocation6], %s223
        %s225 = sand.u32 %s76, 1
        %s226 = smul.addr %s225, 6
        %s227 = scalar_lea.vmem [#allocation7], %s226
        %p228 = pneg %p89
        %p229 = pneg %p86
        %p230 = pneg %p115
        %p231 = pneg %p112
        %s232 = sand.u32 %s102, 1
        %s233 = scalar_lea.sflag [#allocation4], %s232
        %s234 = sand.u32 %s102, 1
        %s235 = smul.addr %s234, 12
        %s236 = scalar_lea.vmem [#allocation8], %s235
        %s237 = smul.u32 6, %s21
        %s238 = smul.u32 6, %s21
        %s239 = smul.u32 6, %s21
        %v241 = vld [vmem:[%s209] sm:$0x3f]
        %v242 = vld [vmem:[#allocation2] sm:$0x3]
        %v243 = vld [vmem:[%s200] sm:$0xff]
        %v244 = vld [vmem:[%s200 + $0x8] sm:$0xff]
        %v245 = vld [vmem:[%s200 + $0x10] sm:$0xff]
        %v246 = vld [vmem:[%s200 + $0x18] sm:$0xff]
        %v247 = vld [vmem:[%s200 + $0x20] sm:$0xff]
        %v248 = vld [vmem:[%s200 + $0x28] sm:$0xff]
        %v249 = vld [vmem:[%s200 + $0x30] sm:$0xff]
        %v250 = vld [vmem:[%s200 + $0x38] sm:$0xff]
        %v251 = vld [vmem:[%s200 + $0x40] sm:$0xff]
        %v252 = vld [vmem:[%s200 + $0x48] sm:$0xff]
        %v253 = vld [vmem:[%s200 + $0x50] sm:$0xff]
        %v254 = vld [vmem:[%s200 + $0x58] sm:$0xff]
        %v255 = vld [vmem:[%s200 + $0x60] sm:$0xff]
        %v256 = vld [vmem:[%s200 + $0x68] sm:$0xff]
        %v257 = vld [vmem:[%s200 + $0x70] sm:$0xff]
        %v258 = vld [vmem:[%s200 + $0x78] sm:$0xff]
        %v259 = vld [vmem:[%s200 + $0x80] sm:$0xff]
        %v260 = vld [vmem:[%s200 + $0x88] sm:$0xff]
        %v261 = vld [vmem:[%s200 + $0x90] sm:$0xff]
        %v262 = vld [vmem:[%s200 + $0x98] sm:$0xff]
        %v263 = vld [vmem:[%s200 + $0xa0] sm:$0xff]
        %v264 = vld [vmem:[%s200 + $0xa8] sm:$0xff]
        %v265 = vld [vmem:[%s200 + $0xb0] sm:$0xff]
        %v266 = vld [vmem:[%s200 + $0xb8] sm:$0xff]
        %v267 = vld [vmem:[%s200 + $0xc0] sm:$0xff]
        %v268 = vld [vmem:[%s200 + $0xc8] sm:$0xff]
        %v269 = vld [vmem:[%s200 + $0xd0] sm:$0xff]
        %v270 = vld [vmem:[%s200 + $0xd8] sm:$0xff]
        %v271 = vld [vmem:[%s200 + $0xe0] sm:$0xff]
        %v272 = vld [vmem:[%s200 + $0xe8] sm:$0xff]
        %v273 = vld [vmem:[%s200 + $0xf0] sm:$0xff]
        %v274 = vld [vmem:[%s200 + $0xf8] sm:$0xff]
        %v275 = vld [vmem:[%s200 + $0x100] sm:$0xff]
        %v276 = vld [vmem:[%s200 + $0x108] sm:$0xff]
        %v277 = vld [vmem:[%s200 + $0x110] sm:$0xff]
        %v278 = vld [vmem:[%s200 + $0x118] sm:$0xff]
        %v279 = vld [vmem:[%s200 + $0x120] sm:$0xff]
        %v280 = vld [vmem:[%s200 + $0x128] sm:$0xff]
        %v281 = vld [vmem:[%s200 + $0x130] sm:$0xff]
        %v282 = vld [vmem:[%s200 + $0x138] sm:$0xff]
        %v283 = vld [vmem:[%s200 + $0x140] sm:$0xff]
        %v284 = vld [vmem:[%s200 + $0x148] sm:$0xff]
        %v285 = vld [vmem:[%s200 + $0x150] sm:$0xff]
        %v286 = vld [vmem:[%s200 + $0x158] sm:$0xff]
        %v287 = vld [vmem:[%s200 + $0x160] sm:$0xff]
        %v288 = vld [vmem:[%s200 + $0x168] sm:$0xff]
        %v289 = vld [vmem:[%s200 + $0x170] sm:$0xff]
        %v290 = vld [vmem:[%s200 + $0x178] sm:$0xff]
        %v291 = vld [vmem:[%s200 + $0x180] sm:$0xff]
        %v292 = vld [vmem:[%s200 + $0x188] sm:$0xff]
        %v293 = vld [vmem:[%s200 + $0x190] sm:$0xff]
        %v294 = vld [vmem:[%s200 + $0x198] sm:$0xff]
        %v295 = vld [vmem:[%s200 + $0x1a0] sm:$0xff]
        %v296 = vld [vmem:[%s200 + $0x1a8] sm:$0xff]
        %v297 = vld [vmem:[%s200 + $0x1b0] sm:$0xff]
        %v298 = vld [vmem:[%s200 + $0x1b8] sm:$0xff]
        %v299 = vld [vmem:[%s200 + $0x1c0] sm:$0xff]
        %v300 = vld [vmem:[%s200 + $0x1c8] sm:$0xff]
        %v301 = vld [vmem:[%s200 + $0x1d0] sm:$0xff]
        %v302 = vld [vmem:[%s200 + $0x1d8] sm:$0xff]
        %v303 = vld [vmem:[%s200 + $0x1e0] sm:$0xff]
        %v304 = vld [vmem:[%s200 + $0x1e8] sm:$0xff]
        %v305 = vld [vmem:[%s200 + $0x1f0] sm:$0xff]
        %v306 = vld [vmem:[%s200 + $0x1f8] sm:$0xff]
        %v307 = vld [vmem:[%s200 + $0x200] sm:$0xff]
        %v308 = vld [vmem:[%s200 + $0x208] sm:$0xff]
        %v309 = vld [vmem:[%s200 + $0x210] sm:$0xff]
        %v310 = vld [vmem:[%s200 + $0x218] sm:$0xff]
        %v311 = vld [vmem:[%s200 + $0x220] sm:$0xff]
        %v312 = vld [vmem:[%s200 + $0x228] sm:$0xff]
        %v313 = vld [vmem:[%s200 + $0x230] sm:$0xff]
        %v314 = vld [vmem:[%s200 + $0x238] sm:$0xff]
        %v315 = vld [vmem:[%s200 + $0x240] sm:$0xff]
        %v316 = vld [vmem:[%s200 + $0x248] sm:$0xff]
        %v317 = vld [vmem:[%s200 + $0x250] sm:$0xff]
        %v318 = vld [vmem:[%s200 + $0x258] sm:$0xff]
        %v319 = vld [vmem:[%s200 + $0x260] sm:$0xff]
        %v320 = vld [vmem:[%s200 + $0x268] sm:$0xff]
        %v321 = vld [vmem:[%s200 + $0x270] sm:$0xff]
        %v322 = vld [vmem:[%s200 + $0x278] sm:$0xff]
        %v323 = vld [vmem:[%s200 + $0x280] sm:$0xff]
        %v324 = vld [vmem:[%s200 + $0x288] sm:$0x11]
        %v325 = vld [vmem:[%s200 + $0x290] sm:$0x11]
        %v326 = vld [vmem:[%s200 + $0x298] sm:$0x11]
        %v329 = vunpack.c.l.s4 1966171168
        %v330 = vunpack.c.0.s8 %v329
        %v331 = vlaneseq
        %v332 = vshrl.u32 %v331, 7
        %v333 = vsub.s32 %v330, %v332
        %v334 = vrot.slane %v242, %v333
        %v335 = vcombine.high %v334, %v334
        %v337 = vunpack.c.l.s4 1966171168
        %v338 = vunpack.c.0.s8 %v337
        %v339 = vlaneseq
        %v340 = vshrl.u32 %v339, 7
        %v341 = vsub.s32 %v338, %v340
        %v342 = vrot.slane %v334, %v341
        %v344 = vunpack.c.l.s4 1966171168
        %v345 = vunpack.c.0.s8 %v344
        %v346 = vlaneseq
        %v347 = vshrl.u32 %v346, 7
        %v348 = vsub.s32 %v345, %v347
        %v349 = vrot.slane %v335, %v348
        %v435 = vunpack.c.l.b16 %v243
        %v436 = vunpack.c.h.b16 %v243
        %v437 = vunpack.c.l.b16 %v244
        %v438 = vunpack.c.h.b16 %v244
        %v439 = vunpack.c.l.b16 %v245
        %v440 = vunpack.c.h.b16 %v245
        %v441 = vunpack.c.l.b16 %v246
        %v442 = vunpack.c.h.b16 %v246
        %v443 = vunpack.c.l.b16 %v247
        %v444 = vunpack.c.h.b16 %v247
        %v445 = vunpack.c.l.b16 %v248
        %v446 = vunpack.c.h.b16 %v248
        %v447 = vunpack.c.l.b16 %v249
        %v448 = vunpack.c.h.b16 %v249
        %v449 = vunpack.c.l.b16 %v250
        %v450 = vunpack.c.h.b16 %v250
        %v451 = vunpack.c.l.b16 %v251
        %v452 = vunpack.c.h.b16 %v251
        %v453 = vunpack.c.l.b16 %v252
        %v454 = vunpack.c.h.b16 %v252
        %v455 = vunpack.c.l.b16 %v253
        %v456 = vunpack.c.h.b16 %v253
        %v457 = vunpack.c.l.b16 %v254
        %v458 = vunpack.c.h.b16 %v254
        %v459 = vunpack.c.l.b16 %v255
        %v460 = vunpack.c.h.b16 %v255
        %v461 = vunpack.c.l.b16 %v256
        %v462 = vunpack.c.h.b16 %v256
        %v463 = vunpack.c.l.b16 %v257
        %v464 = vunpack.c.h.b16 %v257
        %v465 = vunpack.c.l.b16 %v258
        %v466 = vunpack.c.h.b16 %v258
        %v467 = vunpack.c.l.b16 %v259
        %v468 = vunpack.c.h.b16 %v259
        %v469 = vunpack.c.l.b16 %v260
        %v470 = vunpack.c.h.b16 %v260
        %v471 = vunpack.c.l.b16 %v261
        %v472 = vunpack.c.h.b16 %v261
        %v473 = vunpack.c.l.b16 %v262
        %v474 = vunpack.c.h.b16 %v262
        %v475 = vunpack.c.l.b16 %v263
        %v476 = vunpack.c.h.b16 %v263
        %v477 = vunpack.c.l.b16 %v264
        %v478 = vunpack.c.h.b16 %v264
        %v479 = vunpack.c.l.b16 %v265
        %v480 = vunpack.c.h.b16 %v265
        %v481 = vunpack.c.l.b16 %v266
        %v482 = vunpack.c.h.b16 %v266
        %v483 = vunpack.c.l.b16 %v267
        %v484 = vunpack.c.h.b16 %v267
        %v485 = vunpack.c.l.b16 %v268
        %v486 = vunpack.c.h.b16 %v268
        %v487 = vunpack.c.l.b16 %v269
        %v488 = vunpack.c.h.b16 %v269
        %v489 = vunpack.c.l.b16 %v270
        %v490 = vunpack.c.h.b16 %v270
        %v491 = vunpack.c.l.b16 %v271
        %v492 = vunpack.c.h.b16 %v271
        %v493 = vunpack.c.l.b16 %v272
        %v494 = vunpack.c.h.b16 %v272
        %v495 = vunpack.c.l.b16 %v273
        %v496 = vunpack.c.h.b16 %v273
        %v497 = vunpack.c.l.b16 %v274
        %v498 = vunpack.c.h.b16 %v274
        %v499 = vunpack.c.l.b16 %v275
        %v500 = vunpack.c.h.b16 %v275
        %v501 = vunpack.c.l.b16 %v276
        %v502 = vunpack.c.h.b16 %v276
        %v503 = vunpack.c.l.b16 %v277
        %v504 = vunpack.c.h.b16 %v277
        %v505 = vunpack.c.l.b16 %v278
        %v506 = vunpack.c.h.b16 %v278
        %v507 = vunpack.c.l.b16 %v279
        %v508 = vunpack.c.h.b16 %v279
        %v509 = vunpack.c.l.b16 %v280
        %v510 = vunpack.c.h.b16 %v280
        %v511 = vunpack.c.l.b16 %v281
        %v512 = vunpack.c.h.b16 %v281
        %v513 = vunpack.c.l.b16 %v282
        %v514 = vunpack.c.h.b16 %v282
        %v515 = vunpack.c.l.b16 %v283
        %v516 = vunpack.c.h.b16 %v283
        %v517 = vunpack.c.l.b16 %v284
        %v518 = vunpack.c.h.b16 %v284
        %v519 = vunpack.c.l.b16 %v285
        %v520 = vunpack.c.h.b16 %v285
        %v521 = vunpack.c.l.b16 %v286
        %v522 = vunpack.c.h.b16 %v286
        %v523 = vunpack.c.l.b16 %v287
        %v524 = vunpack.c.h.b16 %v287
        %v525 = vunpack.c.l.b16 %v288
        %v526 = vunpack.c.h.b16 %v288
        %v527 = vunpack.c.l.b16 %v289
        %v528 = vunpack.c.h.b16 %v289
        %v529 = vunpack.c.l.b16 %v290
        %v530 = vunpack.c.h.b16 %v290
        %v531 = vunpack.c.l.b16 %v291
        %v532 = vunpack.c.h.b16 %v291
        %v533 = vunpack.c.l.b16 %v292
        %v534 = vunpack.c.h.b16 %v292
        %v535 = vunpack.c.l.b16 %v293
        %v536 = vunpack.c.h.b16 %v293
        %v537 = vunpack.c.l.b16 %v294
        %v538 = vunpack.c.h.b16 %v294
        %v539 = vunpack.c.l.b16 %v295
        %v540 = vunpack.c.h.b16 %v295
        %v541 = vunpack.c.l.b16 %v296
        %v542 = vunpack.c.h.b16 %v296
        %v543 = vunpack.c.l.b16 %v297
        %v544 = vunpack.c.h.b16 %v297
        %v545 = vunpack.c.l.b16 %v298
        %v546 = vunpack.c.h.b16 %v298
        %v547 = vunpack.c.l.b16 %v299
        %v548 = vunpack.c.h.b16 %v299
        %v549 = vunpack.c.l.b16 %v300
        %v550 = vunpack.c.h.b16 %v300
        %v551 = vunpack.c.l.b16 %v301
        %v552 = vunpack.c.h.b16 %v301
        %v553 = vunpack.c.l.b16 %v302
        %v554 = vunpack.c.h.b16 %v302
        %v555 = vunpack.c.l.b16 %v303
        %v556 = vunpack.c.h.b16 %v303
        %v557 = vunpack.c.l.b16 %v304
        %v558 = vunpack.c.h.b16 %v304
        %v559 = vunpack.c.l.b16 %v305
        %v560 = vunpack.c.h.b16 %v305
        %v561 = vunpack.c.l.b16 %v306
        %v562 = vunpack.c.h.b16 %v306
        %v563 = vunpack.c.l.b16 %v307
        %v564 = vunpack.c.h.b16 %v307
        %v565 = vunpack.c.l.b16 %v308
        %v566 = vunpack.c.h.b16 %v308
        %v567 = vunpack.c.l.b16 %v309
        %v568 = vunpack.c.h.b16 %v309
        %v569 = vunpack.c.l.b16 %v310
        %v570 = vunpack.c.h.b16 %v310
        %v571 = vunpack.c.l.b16 %v311
        %v572 = vunpack.c.h.b16 %v311
        %v573 = vunpack.c.l.b16 %v312
        %v574 = vunpack.c.h.b16 %v312
        %v575 = vunpack.c.l.b16 %v313
        %v576 = vunpack.c.h.b16 %v313
        %v577 = vunpack.c.l.b16 %v314
        %v578 = vunpack.c.h.b16 %v314
        %v579 = vunpack.c.l.b16 %v315
        %v580 = vunpack.c.h.b16 %v315
        %v581 = vunpack.c.l.b16 %v316
        %v582 = vunpack.c.h.b16 %v316
        %v583 = vunpack.c.l.b16 %v317
        %v584 = vunpack.c.h.b16 %v317
        %v585 = vunpack.c.l.b16 %v318
        %v586 = vunpack.c.h.b16 %v318
        %v587 = vunpack.c.l.b16 %v319
        %v588 = vunpack.c.h.b16 %v319
        %v589 = vunpack.c.l.b16 %v320
        %v590 = vunpack.c.h.b16 %v320
        %v591 = vunpack.c.l.b16 %v321
        %v592 = vunpack.c.h.b16 %v321
        %v593 = vunpack.c.l.b16 %v322
        %v594 = vunpack.c.h.b16 %v322
        %v595 = vunpack.c.l.b16 %v323
        %v596 = vunpack.c.h.b16 %v323
        %v597 = vunpack.c.l.b16 %v324
        %v598 = vunpack.c.h.b16 %v324
        %v599 = vunpack.c.l.b16 %v325
        %v600 = vunpack.c.h.b16 %v325
        %v601 = vunpack.c.l.b16 %v326
        %v602 = vunpack.c.h.b16 %v326
        %v603 = vpack.c.b16 %v441, %v435
        %v604 = vpack.c.b16 %v442, %v436
        %v605 = vpack.c.b16 %v443, %v437
        %v606 = vpack.c.b16 %v444, %v438
        %v607 = vpack.c.b16 %v445, %v439
        %v608 = vpack.c.b16 %v446, %v440
        %v609 = vpack.c.b16 %v453, %v447
        %v610 = vpack.c.b16 %v454, %v448
        %v611 = vpack.c.b16 %v455, %v449
        %v612 = vpack.c.b16 %v456, %v450
        %v613 = vpack.c.b16 %v457, %v451
        %v614 = vpack.c.b16 %v458, %v452
        %v615 = vpack.c.b16 %v465, %v459
        %v616 = vpack.c.b16 %v466, %v460
        %v617 = vpack.c.b16 %v467, %v461
        %v618 = vpack.c.b16 %v468, %v462
        %v619 = vpack.c.b16 %v469, %v463
        %v620 = vpack.c.b16 %v470, %v464
        %v621 = vpack.c.b16 %v477, %v471
        %v622 = vpack.c.b16 %v478, %v472
        %v623 = vpack.c.b16 %v479, %v473
        %v624 = vpack.c.b16 %v480, %v474
        %v625 = vpack.c.b16 %v481, %v475
        %v626 = vpack.c.b16 %v482, %v476
        %v627 = vpack.c.b16 %v489, %v483
        %v628 = vpack.c.b16 %v490, %v484
        %v629 = vpack.c.b16 %v491, %v485
        %v630 = vpack.c.b16 %v492, %v486
        %v631 = vpack.c.b16 %v493, %v487
        %v632 = vpack.c.b16 %v494, %v488
        %v633 = vpack.c.b16 %v501, %v495
        %v634 = vpack.c.b16 %v502, %v496
        %v635 = vpack.c.b16 %v503, %v497
        %v636 = vpack.c.b16 %v504, %v498
        %v637 = vpack.c.b16 %v505, %v499
        %v638 = vpack.c.b16 %v506, %v500
        %v639 = vpack.c.b16 %v513, %v507
        %v640 = vpack.c.b16 %v514, %v508
        %v641 = vpack.c.b16 %v515, %v509
        %v642 = vpack.c.b16 %v516, %v510
        %v643 = vpack.c.b16 %v517, %v511
        %v644 = vpack.c.b16 %v518, %v512
        %v645 = vpack.c.b16 %v525, %v519
        %v646 = vpack.c.b16 %v526, %v520
        %v647 = vpack.c.b16 %v527, %v521
        %v648 = vpack.c.b16 %v528, %v522
        %v649 = vpack.c.b16 %v529, %v523
        %v650 = vpack.c.b16 %v530, %v524
        %v651 = vpack.c.b16 %v537, %v531
        %v652 = vpack.c.b16 %v538, %v532
        %v653 = vpack.c.b16 %v539, %v533
        %v654 = vpack.c.b16 %v540, %v534
        %v655 = vpack.c.b16 %v541, %v535
        %v656 = vpack.c.b16 %v542, %v536
        %v657 = vpack.c.b16 %v549, %v543
        %v658 = vpack.c.b16 %v550, %v544
        %v659 = vpack.c.b16 %v551, %v545
        %v660 = vpack.c.b16 %v552, %v546
        %v661 = vpack.c.b16 %v553, %v547
        %v662 = vpack.c.b16 %v554, %v548
        %v663 = vpack.c.b16 %v561, %v555
        %v664 = vpack.c.b16 %v562, %v556
        %v665 = vpack.c.b16 %v563, %v557
        %v666 = vpack.c.b16 %v564, %v558
        %v667 = vpack.c.b16 %v565, %v559
        %v668 = vpack.c.b16 %v566, %v560
        %v669 = vpack.c.b16 %v573, %v567
        %v670 = vpack.c.b16 %v574, %v568
        %v671 = vpack.c.b16 %v575, %v569
        %v672 = vpack.c.b16 %v576, %v570
        %v673 = vpack.c.b16 %v577, %v571
        %v674 = vpack.c.b16 %v578, %v572
        %v675 = vpack.c.b16 %v585, %v579
        %v676 = vpack.c.b16 %v586, %v580
        %v677 = vpack.c.b16 %v587, %v581
        %v678 = vpack.c.b16 %v588, %v582
        %v679 = vpack.c.b16 %v589, %v583
        %v680 = vpack.c.b16 %v590, %v584
        %v681 = vpack.c.b16 %v597, %v591
        %v682 = vpack.c.b16 %v598, %v592
        %v683 = vpack.c.b16 %v599, %v593
        %v684 = vpack.c.b16 %v600, %v594
        %v685 = vpack.c.b16 %v601, %v595
        %v686 = vpack.c.b16 %v602, %v596
        %vm765 = vcmask 728064
        %v767 = vsel %vm765, %v349, 0
        %vm769 = vcmask 1043456
        %vm770 = vcmask 1044480
        %v771 = vsel %vm769, 4294967295, 65535
        %v772 = vsel %vm770, %v771, 0
        %v774 = vand.u32 %v681, %v772
        %v777 = vand.u32 %v682, %v772
        %v780 = vand.u32 %v683, %v772
        %v783 = vand.u32 %v684, %v772
        %v786 = vand.u32 %v685, %v772
        %v789 = vand.u32 %v686, %v772
        %791 = vmatprep.subr.bf16.mxu0 %v604
        %792 = vmatpush1.bf16.msra.mxu0 %v603
        %793 = vmatprep.subr.bf16.mxu0 %v610
        %794 = vmatpush1.bf16.msra.mxu0 %v609
        %795 = vmatprep.subr.bf16.mxu0 %v616
        %796 = vmatpush1.bf16.msra.mxu0 %v615
        %797 = vmatprep.subr.bf16.mxu0 %v622
        %798 = vmatpush1.bf16.msra.mxu0 %v621
        %799 = vmatprep.subr.bf16.mxu0 %v628
        %800 = vmatpush1.bf16.msra.mxu0 %v627
        %801 = vmatprep.subr.bf16.mxu0 %v634
        %802 = vmatpush1.bf16.msra.mxu0 %v633
        %803 = vmatprep.subr.bf16.mxu0 %v640
        %804 = vmatpush1.bf16.msra.mxu0 %v639
        %805 = vmatprep.subr.bf16.mxu0 %v646
        %806 = vmatpush1.bf16.msra.mxu0 %v645
        %807 = vmatprep.subr.bf16.mxu0 %v652
        %808 = vmatpush1.bf16.msra.mxu0 %v651
        %809 = vmatprep.subr.bf16.mxu0 %v658
        %810 = vmatpush1.bf16.msra.mxu0 %v657
        %811 = vmatprep.subr.bf16.mxu0 %v664
        %812 = vmatpush1.bf16.msra.mxu0 %v663
        %813 = vmatprep.subr.bf16.mxu0 %v670
        %814 = vmatpush1.bf16.msra.mxu0 %v669
        %815 = vmatprep.subr.bf16.mxu0 %v676
        %816 = vmatpush1.bf16.msra.mxu0 %v675
        %817 = vmatprep.subr.bf16.mxu0 %v777
        %818 = vmatpush1.bf16.msra.mxu0 %v774
        %819 = vmatprep.subr.bf16.mxu0 0
        %820 = vmatpush1.bf16.msra.mxu0 0
        %821 = vmatprep.subr.bf16.mxu0 0
        %822 = vmatpush1.bf16.msra.mxu0 0
        %823 = vmatprep.mubr.bf16.mxu0 %v767
        %824 = vmatmul.mubr.bf16.gmra.mrb[0].mxu0 %v342
        %v825 = vpop.f32.mrb[0].mxu0
        %v826 = vadd.f32 0.0, %v825
        %v827 = vpop.f32.mrb[0].mxu0
        %v828 = vadd.f32 0.0, %v827
        %v829 = vpop.f32.mrb[0].mxu0
        %v830 = vpop.f32.mrb[0].mxu0
        %831 = vdwg.mxu0
        %832 = vmatprep.subr.bf16.mxu0 %v606
        %833 = vmatpush1.bf16.msra.mxu0 %v605
        %834 = vmatprep.subr.bf16.mxu0 %v612
        %835 = vmatpush1.bf16.msra.mxu0 %v611
        %836 = vmatprep.subr.bf16.mxu0 %v618
        %837 = vmatpush1.bf16.msra.mxu0 %v617
        %838 = vmatprep.subr.bf16.mxu0 %v624
        %839 = vmatpush1.bf16.msra.mxu0 %v623
        %840 = vmatprep.subr.bf16.mxu0 %v630
        %841 = vmatpush1.bf16.msra.mxu0 %v629
        %842 = vmatprep.subr.bf16.mxu0 %v636
        %843 = vmatpush1.bf16.msra.mxu0 %v635
        %844 = vmatprep.subr.bf16.mxu0 %v642
        %845 = vmatpush1.bf16.msra.mxu0 %v641
        %846 = vmatprep.subr.bf16.mxu0 %v648
        %847 = vmatpush1.bf16.msra.mxu0 %v647
        %848 = vmatprep.subr.bf16.mxu0 %v654
        %849 = vmatpush1.bf16.msra.mxu0 %v653
        %850 = vmatprep.subr.bf16.mxu0 %v660
        %851 = vmatpush1.bf16.msra.mxu0 %v659
        %852 = vmatprep.subr.bf16.mxu0 %v666
        %853 = vmatpush1.bf16.msra.mxu0 %v665
        %854 = vmatprep.subr.bf16.mxu0 %v672
        %855 = vmatpush1.bf16.msra.mxu0 %v671
        %856 = vmatprep.subr.bf16.mxu0 %v678
        %857 = vmatpush1.bf16.msra.mxu0 %v677
        %858 = vmatprep.subr.bf16.mxu0 %v783
        %859 = vmatpush1.bf16.msra.mxu0 %v780
        %860 = vmatprep.subr.bf16.mxu0 0
        %861 = vmatpush1.bf16.msra.mxu0 0
        %862 = vmatprep.subr.bf16.mxu0 0
        %863 = vmatpush1.bf16.msra.mxu0 0
        %864 = vmatprep.mubr.bf16.mxu0 %v767
        %865 = vmatmul.mubr.bf16.gmra.mrb[0].mxu0 %v342
        %v866 = vpop.f32.mrb[0].mxu0
        %v867 = vadd.f32 0.0, %v866
        %v868 = vpop.f32.mrb[0].mxu0
        %v869 = vadd.f32 0.0, %v868
        %v870 = vpop.f32.mrb[0].mxu0
        %v871 = vpop.f32.mrb[0].mxu0
        %872 = vdwg.mxu0
        %873 = vmatprep.subr.bf16.mxu0 %v608
        %874 = vmatpush1.bf16.msra.mxu0 %v607
        %875 = vmatprep.subr.bf16.mxu0 %v614
        %876 = vmatpush1.bf16.msra.mxu0 %v613
        %877 = vmatprep.subr.bf16.mxu0 %v620
        %878 = vmatpush1.bf16.msra.mxu0 %v619
        %879 = vmatprep.subr.bf16.mxu0 %v626
        %880 = vmatpush1.bf16.msra.mxu0 %v625
        %881 = vmatprep.subr.bf16.mxu0 %v632
        %882 = vmatpush1.bf16.msra.mxu0 %v631
        %883 = vmatprep.subr.bf16.mxu0 %v638
        %884 = vmatpush1.bf16.msra.mxu0 %v637
        %885 = vmatprep.subr.bf16.mxu0 %v644
        %886 = vmatpush1.bf16.msra.mxu0 %v643
        %887 = vmatprep.subr.bf16.mxu0 %v650
        %888 = vmatpush1.bf16.msra.mxu0 %v649
        %889 = vmatprep.subr.bf16.mxu0 %v656
        %890 = vmatpush1.bf16.msra.mxu0 %v655
        %891 = vmatprep.subr.bf16.mxu0 %v662
        %892 = vmatpush1.bf16.msra.mxu0 %v661
        %893 = vmatprep.subr.bf16.mxu0 %v668
        %894 = vmatpush1.bf16.msra.mxu0 %v667
        %895 = vmatprep.subr.bf16.mxu0 %v674
        %896 = vmatpush1.bf16.msra.mxu0 %v673
        %897 = vmatprep.subr.bf16.mxu0 %v680
        %898 = vmatpush1.bf16.msra.mxu0 %v679
        %899 = vmatprep.subr.bf16.mxu0 %v789
        %900 = vmatpush1.bf16.msra.mxu0 %v786
        %901 = vmatprep.subr.bf16.mxu0 0
        %902 = vmatpush1.bf16.msra.mxu0 0
        %903 = vmatprep.subr.bf16.mxu0 0
        %904 = vmatpush1.bf16.msra.mxu0 0
        %905 = vmatprep.mubr.bf16.mxu0 %v767
        %906 = vmatmul.mubr.bf16.gmra.mrb[0].mxu0 %v342
        %v907 = vpop.f32.mrb[0].mxu0
        %v908 = vadd.f32 0.0, %v907
        %v909 = vpop.f32.mrb[0].mxu0
        %v910 = vadd.f32 0.0, %v909
        %v911 = vpop.f32.mrb[0].mxu0
        %v912 = vpop.f32.mrb[0].mxu0
        %913 = vdwg.mxu0
        %v915 = vlaneseq
        %v916 = vshrl.u32 %v915, 7
        %v917 = vsub.s32 0, %v916
        %v918 = vrot.slane %v241, %v917
        %v919 = vlaneseq
        %v920 = vshrl.u32 %v919, 7
        %v921 = vsub.s32 1, %v920
        %v922 = vrot.slane %v241, %v921
        %v923 = vlaneseq
        %v924 = vshrl.u32 %v923, 7
        %v925 = vsub.s32 2, %v924
        %v926 = vrot.slane %v241, %v925
        %v927 = vlaneseq
        %v928 = vshrl.u32 %v927, 7
        %v929 = vsub.s32 3, %v928
        %v930 = vrot.slane %v241, %v929
        %v931 = vlaneseq
        %v932 = vshrl.u32 %v931, 7
        %v933 = vsub.s32 4, %v932
        %v934 = vrot.slane %v241, %v933
        %v935 = vlaneseq
        %v936 = vshrl.u32 %v935, 7
        %v937 = vsub.s32 5, %v936
        %v938 = vrot.slane %v241, %v937
        %v945 = vadd.f32 %v918, %v826
        %v946 = vadd.f32 %v922, %v828
        %v947 = vadd.f32 %v926, %v867
        %v948 = vadd.f32 %v930, %v869
        %v949 = vadd.f32 %v934, %v908
        %v950 = vadd.f32 %v938, %v910
        %v957 = vcombine.low %v945, %v946
        %v958 = vcombine.low %v947, %v948
        %v960 = vunpack.c.l.s4 1983009808
        %v961 = vunpack.c.0.s8 %v960
        %v962 = vlaneseq
        %v963 = vshrl.u32 %v962, 7
        %v964 = vsub.s32 %v961, %v963
        %v965 = vrot.slane %v957, %v964
        %v967 = vunpack.c.l.s4 1983009808
        %v968 = vunpack.c.0.s8 %v967
        %v969 = vlaneseq
        %v970 = vshrl.u32 %v969, 7
        %v971 = vsub.s32 %v968, %v970
        %v972 = vrot.slane %v958, %v971
        %v973 = vcombine.low %v965, %v972
        %v974 = vcombine.low %v949, %v950
        %v976 = vunpack.c.l.s4 1983009808
        %v977 = vunpack.c.0.s8 %v976
        %v978 = vlaneseq
        %v979 = vshrl.u32 %v978, 7
        %v980 = vsub.s32 %v977, %v979
        %v981 = vrot.slane %v974, %v980
        %984 = vst [vmem:[%s236] sm:$0xff] %v973
        %985 = vst [vmem:[%s236 + $0x8] sm:$0xf] %v981
        %s986 = sand.u32 %s102, 1
        %s987 = scalar_lea.sflag [#allocation4], %s986
        %s988 = sand.u32 %s102, 1
        %s989 = smul.addr %s988, 12
        %s990 = scalar_lea.vmem [#allocation8], %s989
        // Predicated region
        $region45: #{tpu_custom_call.1} parent=31 // pred_check
          %p991 = pneg %p112
        $region46: #{tpu_custom_call.1} parent=31 // pred_check_branch
          %993 = sbr.rel (%p991) target = $region48
        $region47: #{tpu_custom_call.1} parent=31 // pred_region
          %s994 = smul.u32 6, %s21
          %s996 = ssub.s32 192, 192
          %997 = vsyncadd %s987, %s996
          %s998 = smul.addr %s994, 32
          %s999 = scalar_lea.hbm %s3, %s998
          %s1001 = sshll.u32 %s990, 4
          %s1002 = int_to_ptr.vmem [resolvable:$true] %s1001
          %1004 = dma.vmem_to_hbm [thread:$0]  %s1002, 192, %s999, %s987
        $region48: #{tpu_custom_call.1} parent=31 // pred_fallthru
          _
      $region32: #{tpu_custom_call.1} parent=5 // pred_fallthru
        _
      %p1005 = scmp.le.s32.totalorder 2, %s16
      // Predicated region
      $region49: #{tpu_custom_call.1} parent=5 // pred_check
        %p1006 = pneg %p1005
      $region50: #{tpu_custom_call.1} parent=5 // pred_check_branch
        %1008 = sbr.rel (%p1006) target = $region52
      $region51: #{tpu_custom_call.1} parent=5 // pred_region
        %s1009 = ssub.s32 %s16, 2
        // Predicated region
        $region53: #{tpu_custom_call.1} parent=51 // pred_check
          %p1010 = pneg %p118
        $region54: #{tpu_custom_call.1} parent=51 // pred_check_branch
          %1012 = sbr.rel (%p1010) target = $region56
        $region55: #{tpu_custom_call.1} parent=51 // pred_region
          %s1013 = sand.u32 %s103, 1
          %s1014 = scalar_lea.sflag [#allocation4], %s1013
          %s1015 = sand.u32 %s103, 1
          %s1016 = smul.addr %s1015, 12
          %s1017 = scalar_lea.vmem [#allocation8], %s1016
          %1018 = dma.done %s1014, 192
        $region56: #{tpu_custom_call.1} parent=51 // pred_fallthru
          _
      $region52: #{tpu_custom_call.1} parent=5 // pred_fallthru
        _
    $region6: #{tpu_custom_call.1} parent=1 // loop_footer
      %s20 = sadd.s32 1, %s16
    $region7: #{tpu_custom_call.1} parent=1 // loop_footer_branch
      %15 = sbr.rel target = $region3
    $region8: #{tpu_custom_call.1} parent=1 // loop_exit
      _
    %1019 = vsyncpa [#allocation3], 1
    %s1020 = scalar_lea.sflag [#allocation3], 1
    %1021 = vsyncpa %s1020, 1
    %1022 = vsyncpa [#allocation6], 1
    %s1023 = scalar_lea.sflag [#allocation6], 1
    %1024 = vsyncpa %s1023, 1
    %1025 = vsyncpa [#allocation4], 1
    %s1026 = scalar_lea.sflag [#allocation4], 1
    %1027 = vsyncpa %s1026, 1

</llo_original>
